<compile_context>
chip_gen: v7x
topology: tpu7x:2x2x1
jax: 0.10.0
libtpu: 0.0.40
codegen_flags: <defaults>
</compile_context>

<pallas_src>
import functools

import jax
import jax.numpy as jnp
from jax.experimental import pallas as pl
from jax.experimental.pallas import tpu as pltpu


def _attention_kernel(xq_ref, xk_ref, xv_ref,
                      wq_ref, bq_ref, wk_ref, bk_ref, wv_ref, bv_ref,
                      wo_ref, bo_ref,
                      out_ref, *, bt, m, n):
    cdt = wq_ref.dtype  # MXU operand dtype (float32, or bfloat16 for the v6e/v7x fast path)

    xq = xq_ref[...].astype(cdt)          # (bt*m, Dq)
    xk = xk_ref[...].astype(cdt)          # (bt*n, Dk)
    xv = xv_ref[...].astype(cdt)          # (bt*n, Dv)

    # Batch-folded projections: one wide MXU matmul each, f32 accumulation.
    q = jnp.dot(xq, wq_ref[...], preferred_element_type=jnp.float32) + bq_ref[...]
    k = jnp.dot(xk, wk_ref[...], preferred_element_type=jnp.float32) + bk_ref[...]
    v = jnp.dot(xv, wv_ref[...], preferred_element_type=jnp.float32) + bv_ref[...]

    h = q.shape[-1]
    qh = q.astype(cdt).reshape(bt, m, h)   # split only the sublane (row) dim; lanes untouched
    kh = k.astype(cdt).reshape(bt, n, h)
    vh = v.astype(cdt).reshape(bt, n, h)

    # 'multiplicative' compatibility e = Q K^T as a batched dot_general
    # (contraction on the last dim of both operands -- no transposed copy of K).
    e = jnp.einsum("bmd,bnd->bmn", qh, kh, preferred_element_type=jnp.float32)

    # softmax(dim=-1) in f32 (max-subtracted); reciprocal of the denominator on the EUP.
    e = e - jnp.max(e, axis=-1, keepdims=True)
    p = jnp.exp(e)
    a = p * pl.reciprocal(jnp.sum(p, axis=-1, keepdims=True), approx=True)

    o = jnp.einsum("bmn,bnd->bmd", a.astype(cdt), vh,
                   preferred_element_type=jnp.float32)          # (bt, m, h)

    # reduce=True: fc_o applied on the re-folded (bt*m, h) slab (one MXU matmul).
    o2 = o.reshape(bt * m, h).astype(cdt)
    out = jnp.dot(o2, wo_ref[...], preferred_element_type=jnp.float32) + bo_ref[...]
    out_ref[...] = out.astype(out_ref.dtype)


def _choose_block_batch(B, m, n, target_rows=512):
    """How many batch elements to fold into one grid step."""
    bt = max(1, min(B, max(1, target_rows // max(m, 1))))
    while B % bt:
        bt -= 1
    # Keep >= 2 grid steps when possible so megacore / v7x's two TensorCores both get work.
    while bt > 1 and (B // bt) < 2:
        bt -= 1
        while B % bt:
            bt -= 1
    # (8,128) tiling: block sublane extents (bt*m, bt*n) must be multiples of 8
    # unless the block covers the whole array.
    if bt != B and ((bt * m) % 8 != 0 or (bt * n) % 8 != 0):
        bt = B
    return bt


def attention_forward(queries, keys, values, params, *, block_batch=None):
    """queries: (B, m, Dq), keys: (B, n, Dk), values: (B, n, Dv) -> (B, m, Dv)."""
    B, m, Dq = queries.shape
    Bk, n, Dk = keys.shape
    Bv, n2, Dv = values.shape
    assert B == Bk == Bv and n == n2, "batch / set-size mismatch"
    H = params["wq"].shape[1]

    bt = block_batch if block_batch is not None else _choose_block_batch(B, m, n)
    assert B % bt == 0
    grid = (B // bt,)

    # Flatten to 2-D row slabs (free, contiguous reshapes) so each grid step sees one
    # (bt*m, D) / (bt*n, D) tile and the projections are batch-folded matmuls.
    xq = queries.reshape(B * m, Dq)
    xk = keys.reshape(B * n, Dk)
    xv = values.reshape(B * n, Dv)

    def row_spec(rows, d):
        return pl.BlockSpec((rows, d), lambda i: (i, 0))

    def const_spec(shape):
        return pl.BlockSpec(shape, lambda i: (0, 0))

    kernel = functools.partial(_attention_kernel, bt=bt, m=m, n=n)

    out2d = pl.pallas_call(
        kernel,
        out_shape=jax.ShapeDtypeStruct((B * m, Dv), jnp.float32),
        grid_spec=pltpu.PrefetchScalarGridSpec(
            num_scalar_prefetch=0,
            grid=grid,
            in_specs=[
                row_spec(bt * m, Dq),                 # queries slab
                row_spec(bt * n, Dk),                 # keys slab
                row_spec(bt * n, Dv),                 # values slab
                const_spec((Dq, H)), const_spec((1, H)),   # fc_q
                const_spec((Dk, H)), const_spec((1, H)),   # fc_k
                const_spec((Dv, H)), const_spec((1, H)),   # fc_v
                const_spec((H, Dv)), const_spec((1, Dv)),  # fc_o
            ],
            out_specs=row_spec(bt * m, Dv),
        ),
        compiler_params=pltpu.CompilerParams(
            dimension_semantics=("parallel",),
            vmem_limit_bytes=32 * 1024 * 1024,
        ),
    )(xq, xk, xv,
      params["wq"], params["bq"], params["wk"], params["bk"],
      params["wv"], params["bv"], params["wo"], params["bo"])

    return out2d.reshape(B, m, Dv)


def attention_reference(queries, keys, values, params):
    """Pure-JAX replica of Attention.forward with default config (num_heads=1)."""
    q = queries @ params["wq"] + params["bq"]
    k = keys @ params["wk"] + params["bk"]
    v = values @ params["wv"] + params["bv"]
    e = jnp.einsum("bmd,bnd->bmn", q, k)
    a = jax.nn.softmax(e, axis=-1)
    o = jnp.einsum("bmn,bnd->bmd", a, v)
    return o @ params["wo"] + params["bo"]


def init_params(key, query_size, key_size, value_size, num_heads=1, head_size=None):
    # Weights stored as (in, out) so the kernel computes x @ W + b (== PyTorch x @ W.T + b).
    if head_size is None:
        head_size = value_size // num_heads
    assert num_heads == 1, "only the num_heads=1 default is implemented"
    H = num_heads * head_size
    ks = jax.random.split(key, 8)

    def linear(kw, kb, fan_in, fan_out):
        s = fan_in ** -0.5  # PyTorch nn.Linear init: U(-1/sqrt(fan_in), 1/sqrt(fan_in))
        w = jax.random.uniform(kw, (fan_in, fan_out), jnp.float32, -s, s)
        b = jax.random.uniform(kb, (1, fan_out), jnp.float32, -s, s)
        return w, b

    wq, bq = linear(ks[0], ks[1], query_size, H)
    wk, bk = linear(ks[2], ks[3], key_size, H)
    wv, bv = linear(ks[4], ks[5], value_size, H)
    wo, bo = linear(ks[6], ks[7], H, value_size)
    return {"wq": wq, "bq": bq, "wk": wk, "bk": bk,
            "wv": wv, "bv": bv, "wo": wo, "bo": bo}


if __name__ == "__main__":
    B, m, n, D = 2, 8, 8, 32  # query_size = key_size = value_size = D
    key = jax.random.PRNGKey(0)
    kq, kk, kv, kp = jax.random.split(key, 4)
    queries = jax.random.normal(kq, (B, m, D), jnp.float32)
    keys = jax.random.normal(kk, (B, n, D), jnp.float32)
    values = jax.random.normal(kv, (B, n, D), jnp.float32)
    params = init_params(kp, D, D, D)

    ref = attention_reference(queries, keys, values, params)

    # f32 MXU operands. Tolerance is 2e-3 (vs 1e-4 before) only because the softmax
    # denominator now uses the EUP approximate reciprocal per the perf review.
    out = jax.block_until_ready(attention_forward(queries, keys, values, params))
    assert out.shape == (B, m, D)
    assert jnp.allclose(out, ref, atol=2e-3, rtol=2e-3), "f32 kernel mismatch vs reference"

    # bf16 MXU operands with f32 accumulation (v6e/v7x fast path): weights in bf16,
    # activations cast to bf16 inside the kernel (keeps input block tiling dtype-agnostic
    # at these tiny shapes; pass bf16 activations directly once bt*m is a multiple of 16).
    params_bf16 = {k2: v2.astype(jnp.bfloat16) for k2, v2 in params.items()}
    out_bf16 = jax.block_until_ready(attention_forward(queries, keys, values, params_bf16))
    rel_err = jnp.linalg.norm(out_bf16 - ref) / jnp.linalg.norm(ref)
    assert rel_err < 5e-2, f"bf16 kernel relative error too large: {rel_err}"

    print("KERNEL_OK")
</pallas_src>

<mosaic_0001>
module attributes {stable_mosaic.version = 11 : i64} {
  func.func @_attention_kernel(%arg0: i32, %arg1: memref<8x32xf32, #tpu.memory_space<vmem>>, %arg2: memref<8x32xf32, #tpu.memory_space<vmem>>, %arg3: memref<8x32xf32, #tpu.memory_space<vmem>>, %arg4: memref<32x32xf32, #tpu.memory_space<vmem>>, %arg5: memref<1x32xf32, #tpu.memory_space<vmem>>, %arg6: memref<32x32xf32, #tpu.memory_space<vmem>>, %arg7: memref<1x32xf32, #tpu.memory_space<vmem>>, %arg8: memref<32x32xf32, #tpu.memory_space<vmem>>, %arg9: memref<1x32xf32, #tpu.memory_space<vmem>>, %arg10: memref<32x32xf32, #tpu.memory_space<vmem>>, %arg11: memref<1x32xf32, #tpu.memory_space<vmem>>, %arg12: memref<8x32xf32, #tpu.memory_space<vmem>>) attributes {dimension_semantics = [#tpu.dimension_semantics<parallel>], iteration_bounds = array<i64: 2>, scalar_prefetch = 0 : i64, scratch_operands = 0 : i64, tpu.core_type = #tpu.core_type<tc>, window_params = [{transform_indices = @transform_0, window_bounds = array<i64: 8, 32>}, {transform_indices = @transform_1, window_bounds = array<i64: 8, 32>}, {transform_indices = @transform_2, window_bounds = array<i64: 8, 32>}, {pipeline_mode = #tpu.pipeline_mode<synchronous>, transform_indices = @transform_3, window_bounds = array<i64: 32, 32>}, {pipeline_mode = #tpu.pipeline_mode<synchronous>, transform_indices = @transform_4, window_bounds = array<i64: 1, 32>}, {pipeline_mode = #tpu.pipeline_mode<synchronous>, transform_indices = @transform_5, window_bounds = array<i64: 32, 32>}, {pipeline_mode = #tpu.pipeline_mode<synchronous>, transform_indices = @transform_6, window_bounds = array<i64: 1, 32>}, {pipeline_mode = #tpu.pipeline_mode<synchronous>, transform_indices = @transform_7, window_bounds = array<i64: 32, 32>}, {pipeline_mode = #tpu.pipeline_mode<synchronous>, transform_indices = @transform_8, window_bounds = array<i64: 1, 32>}, {pipeline_mode = #tpu.pipeline_mode<synchronous>, transform_indices = @transform_9, window_bounds = array<i64: 32, 32>}, {pipeline_mode = #tpu.pipeline_mode<synchronous>, transform_indices = @transform_10, window_bounds = array<i64: 1, 32>}, {transform_indices = @transform_11, window_bounds = array<i64: 8, 32>}]} {
    %c0 = arith.constant 0 : index
    %c0_0 = arith.constant 0 : index
    %0 = vector.load %arg1[%c0, %c0_0] : memref<8x32xf32, #tpu.memory_space<vmem>>, vector<8x32xf32>
    %c0_1 = arith.constant 0 : index
    %c0_2 = arith.constant 0 : index
    %1 = vector.load %arg2[%c0_1, %c0_2] : memref<8x32xf32, #tpu.memory_space<vmem>>, vector<8x32xf32>
    %c0_3 = arith.constant 0 : index
    %c0_4 = arith.constant 0 : index
    %2 = vector.load %arg3[%c0_3, %c0_4] : memref<8x32xf32, #tpu.memory_space<vmem>>, vector<8x32xf32>
    %c0_5 = arith.constant 0 : index
    %c0_6 = arith.constant 0 : index
    %3 = vector.load %arg4[%c0_5, %c0_6] : memref<32x32xf32, #tpu.memory_space<vmem>>, vector<32x32xf32>
    %cst = arith.constant dense<0.000000e+00> : vector<8x32xf32>
    %4 = tpu.matmul %0, %3, %cst {dimension_numbers = #tpu.dot_dimension_numbers<[1], [0], [0], [1], [0, 0, 1, 1], [], []>} : vector<8x32xf32>, vector<32x32xf32>, vector<8x32xf32> -> vector<8x32xf32>
    %c0_7 = arith.constant 0 : index
    %c0_8 = arith.constant 0 : index
    %5 = vector.load %arg5[%c0_7, %c0_8] : memref<1x32xf32, #tpu.memory_space<vmem>>, vector<1x32xf32>
    %6 = vector.broadcast %5 : vector<1x32xf32> to vector<8x32xf32>
    %7 = arith.addf %4, %6 : vector<8x32xf32>
    %c0_9 = arith.constant 0 : index
    %c0_10 = arith.constant 0 : index
    %8 = vector.load %arg6[%c0_9, %c0_10] : memref<32x32xf32, #tpu.memory_space<vmem>>, vector<32x32xf32>
    %cst_11 = arith.constant dense<0.000000e+00> : vector<8x32xf32>
    %9 = tpu.matmul %1, %8, %cst_11 {dimension_numbers = #tpu.dot_dimension_numbers<[1], [0], [0], [1], [0, 0, 1, 1], [], []>} : vector<8x32xf32>, vector<32x32xf32>, vector<8x32xf32> -> vector<8x32xf32>
    %c0_12 = arith.constant 0 : index
    %c0_13 = arith.constant 0 : index
    %10 = vector.load %arg7[%c0_12, %c0_13] : memref<1x32xf32, #tpu.memory_space<vmem>>, vector<1x32xf32>
    %11 = vector.broadcast %10 : vector<1x32xf32> to vector<8x32xf32>
    %12 = arith.addf %9, %11 : vector<8x32xf32>
    %c0_14 = arith.constant 0 : index
    %c0_15 = arith.constant 0 : index
    %13 = vector.load %arg8[%c0_14, %c0_15] : memref<32x32xf32, #tpu.memory_space<vmem>>, vector<32x32xf32>
    %cst_16 = arith.constant dense<0.000000e+00> : vector<8x32xf32>
    %14 = tpu.matmul %2, %13, %cst_16 {dimension_numbers = #tpu.dot_dimension_numbers<[1], [0], [0], [1], [0, 0, 1, 1], [], []>} : vector<8x32xf32>, vector<32x32xf32>, vector<8x32xf32> -> vector<8x32xf32>
    %c0_17 = arith.constant 0 : index
    %c0_18 = arith.constant 0 : index
    %15 = vector.load %arg9[%c0_17, %c0_18] : memref<1x32xf32, #tpu.memory_space<vmem>>, vector<1x32xf32>
    %16 = vector.broadcast %15 : vector<1x32xf32> to vector<8x32xf32>
    %17 = arith.addf %14, %16 : vector<8x32xf32>
    %18 = vector.shape_cast %7 : vector<8x32xf32> to vector<1x8x32xf32>
    %19 = vector.shape_cast %12 : vector<8x32xf32> to vector<1x8x32xf32>
    %20 = vector.shape_cast %17 : vector<8x32xf32> to vector<1x8x32xf32>
    "tpu.trace_start"() <{level = 10 : i32, message = "bmd,bnd->bmn"}> : () -> ()
    %cst_19 = arith.constant dense<0.000000e+00> : vector<1x8x8xf32>
    %21 = tpu.matmul %18, %19, %cst_19 {dimension_numbers = #tpu.dot_dimension_numbers<[2], [2], [1], [1], [0, 0, 0, 1, 1, 1], [0], [0]>} : vector<1x8x32xf32>, vector<1x8x32xf32>, vector<1x8x8xf32> -> vector<1x8x8xf32>
    "tpu.trace_stop"() : () -> ()
    %cst_20 = arith.constant dense<0xFF800000> : vector<1x8xf32>
    %22 = vector.multi_reduction <maximumf>, %21, %cst_20 [2] : vector<1x8x8xf32> to vector<1x8xf32>
    %23 = vector.shape_cast %22 : vector<1x8xf32> to vector<1x8x1xf32>
    %24 = vector.broadcast %23 : vector<1x8x1xf32> to vector<1x8x8xf32>
    %25 = arith.subf %21, %24 : vector<1x8x8xf32>
    %26 = math.exp %25 : vector<1x8x8xf32>
    %cst_21 = arith.constant dense<0.000000e+00> : vector<1x8xf32>
    %27 = vector.multi_reduction <add>, %26, %cst_21 [2] : vector<1x8x8xf32> to vector<1x8xf32>
    %28 = vector.shape_cast %27 : vector<1x8xf32> to vector<1x8x1xf32>
    %29 = tpu.reciprocal %28 {approx = true} : vector<1x8x1xf32> -> vector<1x8x1xf32>
    %30 = vector.broadcast %29 : vector<1x8x1xf32> to vector<1x8x8xf32>
    %31 = arith.mulf %26, %30 : vector<1x8x8xf32>
    "tpu.trace_start"() <{level = 10 : i32, message = "bmn,bnd->bmd"}> : () -> ()
    %cst_22 = arith.constant dense<0.000000e+00> : vector<1x8x32xf32>
    %32 = tpu.matmul %31, %20, %cst_22 {dimension_numbers = #tpu.dot_dimension_numbers<[2], [1], [1], [2], [0, 0, 0, 1, 1, 2], [0], [0]>} : vector<1x8x8xf32>, vector<1x8x32xf32>, vector<1x8x32xf32> -> vector<1x8x32xf32>
    "tpu.trace_stop"() : () -> ()
    %33 = vector.shape_cast %32 : vector<1x8x32xf32> to vector<8x32xf32>
    %c0_23 = arith.constant 0 : index
    %c0_24 = arith.constant 0 : index
    %34 = vector.load %arg10[%c0_23, %c0_24] : memref<32x32xf32, #tpu.memory_space<vmem>>, vector<32x32xf32>
    %cst_25 = arith.constant dense<0.000000e+00> : vector<8x32xf32>
    %35 = tpu.matmul %33, %34, %cst_25 {dimension_numbers = #tpu.dot_dimension_numbers<[1], [0], [0], [1], [0, 0, 1, 1], [], []>} : vector<8x32xf32>, vector<32x32xf32>, vector<8x32xf32> -> vector<8x32xf32>
    %c0_26 = arith.constant 0 : index
    %c0_27 = arith.constant 0 : index
    %36 = vector.load %arg11[%c0_26, %c0_27] : memref<1x32xf32, #tpu.memory_space<vmem>>, vector<1x32xf32>
    %37 = vector.broadcast %36 : vector<1x32xf32> to vector<8x32xf32>
    %38 = arith.addf %35, %37 : vector<8x32xf32>
    %c0_28 = arith.constant 0 : index
    %c0_29 = arith.constant 0 : index
    %39 = vector.load %arg12[%c0_28, %c0_29] : memref<8x32xf32, #tpu.memory_space<vmem>>, vector<8x32xf32>
    tpu.vector_store %arg12[%c0_28, %c0_29], %38 {strides = array<i32>} : memref<8x32xf32, #tpu.memory_space<vmem>>, vector<8x32xf32>,
    return
  }
  func.func @transform_0(%arg0: i32) -> (i32, i32) {
    %c0_i32 = arith.constant 0 : i32
    %c0_i32_0 = arith.constant 0 : i32
    return %arg0, %c0_i32 : i32, i32
  }
  func.func @transform_1(%arg0: i32) -> (i32, i32) {
    %c0_i32 = arith.constant 0 : i32
    %c0_i32_0 = arith.constant 0 : i32
    return %arg0, %c0_i32 : i32, i32
  }
  func.func @transform_2(%arg0: i32) -> (i32, i32) {
    %c0_i32 = arith.constant 0 : i32
    %c0_i32_0 = arith.constant 0 : i32
    return %arg0, %c0_i32 : i32, i32
  }
  func.func @transform_3(%arg0: i32) -> (i32, i32) {
    %c0_i32 = arith.constant 0 : i32
    %c0_i32_0 = arith.constant 0 : i32
    %c0_i32_1 = arith.constant 0 : i32
    return %c0_i32, %c0_i32_0 : i32, i32
  }
  func.func @transform_4(%arg0: i32) -> (i32, i32) {
    %c0_i32 = arith.constant 0 : i32
    %c0_i32_0 = arith.constant 0 : i32
    %c0_i32_1 = arith.constant 0 : i32
    return %c0_i32, %c0_i32_0 : i32, i32
  }
  func.func @transform_5(%arg0: i32) -> (i32, i32) {
    %c0_i32 = arith.constant 0 : i32
    %c0_i32_0 = arith.constant 0 : i32
    %c0_i32_1 = arith.constant 0 : i32
    return %c0_i32, %c0_i32_0 : i32, i32
  }
  func.func @transform_6(%arg0: i32) -> (i32, i32) {
    %c0_i32 = arith.constant 0 : i32
    %c0_i32_0 = arith.constant 0 : i32
    %c0_i32_1 = arith.constant 0 : i32
    return %c0_i32, %c0_i32_0 : i32, i32
  }
  func.func @transform_7(%arg0: i32) -> (i32, i32) {
    %c0_i32 = arith.constant 0 : i32
    %c0_i32_0 = arith.constant 0 : i32
    %c0_i32_1 = arith.constant 0 : i32
    return %c0_i32, %c0_i32_0 : i32, i32
  }
  func.func @transform_8(%arg0: i32) -> (i32, i32) {
    %c0_i32 = arith.constant 0 : i32
    %c0_i32_0 = arith.constant 0 : i32
    %c0_i32_1 = arith.constant 0 : i32
    return %c0_i32, %c0_i32_0 : i32, i32
  }
  func.func @transform_9(%arg0: i32) -> (i32, i32) {
    %c0_i32 = arith.constant 0 : i32
    %c0_i32_0 = arith.constant 0 : i32
    %c0_i32_1 = arith.constant 0 : i32
    return %c0_i32, %c0_i32_0 : i32, i32
  }
  func.func @transform_10(%arg0: i32) -> (i32, i32) {
    %c0_i32 = arith.constant 0 : i32
    %c0_i32_0 = arith.constant 0 : i32
    %c0_i32_1 = arith.constant 0 : i32
    return %c0_i32, %c0_i32_0 : i32, i32
  }
  func.func @transform_11(%arg0: i32) -> (i32, i32) {
    %c0_i32 = arith.constant 0 : i32
    %c0_i32_0 = arith.constant 0 : i32
    return %arg0, %c0_i32 : i32, i32
  }
}

</mosaic_0001>

<llo_original>
// kernel: tpu_custom_call.1
$region0: #{tpu_custom_call.1}
  #allocation0 [shape = 'u32[]', space=smem, size = 0x4, offset = 0x4, fixed_abs, tag = 'smem constant byte address 0x4 - core index']
  #allocation1 [shape = 'u32[144,128]{1,0:T(1,128)}', space=vmem, size = 0x12000, scoped, tag = 'internal scratch']
  %s0 = inlined_call_operand.hbm [shape: f32[16,32], index: 0, kind: input, shape index: {}]
  %s1 = inlined_call_operand.hbm [shape: f32[16,32], index: 1, kind: input, shape index: {}]
  %s2 = inlined_call_operand.hbm [shape: f32[16,32], index: 2, kind: input, shape index: {}]
  %s3 = inlined_call_operand.hbm [shape: f32[32,32], index: 3, kind: input, shape index: {}]
  %s4 = inlined_call_operand.vmem [shape: f32[1,32], index: 4, kind: input, shape index: {}]
  %s5 = inlined_call_operand.hbm [shape: f32[32,32], index: 5, kind: input, shape index: {}]
  %s6 = inlined_call_operand.vmem [shape: f32[1,32], index: 6, kind: input, shape index: {}]
  %s7 = inlined_call_operand.hbm [shape: f32[32,32], index: 7, kind: input, shape index: {}]
  %s8 = inlined_call_operand.hbm [shape: f32[1,32], index: 8, kind: input, shape index: {}]
  %s9 = inlined_call_operand.vmem [shape: f32[32,32], index: 9, kind: input, shape index: {}]
  %s10 = inlined_call_operand.vmem [shape: f32[1,32], index: 10, kind: input, shape index: {}]
  %s11 = inlined_call_operand.hbm [shape: f32[16,32], index: 11, kind: output, shape index: {}]
  %s12 = sld [smem:[#allocation0]]
  $region105: #{tpu_custom_call.1} parent=0
    _
  %s14 = ssub.s32 1, %s12
  %s15 = scalar_select 0, %s14, %s12
  $region1: #{tpu_custom_call.1} parent=0
    #allocation2 [shape = 'u8[8192]{0}', space=vmem, size = 0x2000, scoped, tag = 'input window, operand 0']
    #allocation3 [shape = 's32[2]{0}', space=sflag, size = 0x8, scoped, tag = 'scoped memory for tpu_custom_call.1']
    #allocation4 [shape = 's32[2]{0}', space=sflag, size = 0x8, scoped, tag = 'scoped memory for tpu_custom_call.1']
    #allocation5 [shape = 'u8[8192]{0}', space=vmem, size = 0x2000, scoped, tag = 'input window, operand 1']
    #allocation6 [shape = 's32[2]{0}', space=sflag, size = 0x8, scoped, tag = 'scoped memory for tpu_custom_call.1']
    #allocation7 [shape = 'u8[8192]{0}', space=vmem, size = 0x2000, scoped, tag = 'input window, operand 2']
    #allocation8 [shape = 'u8[16384]{0}', space=vmem, size = 0x4000, scoped, tag = 'input window, operand 3, single buffered']
    #allocation9 [shape = 's32[1]{0}', space=sflag, size = 0x4, scoped, tag = 'scoped memory for tpu_custom_call.1']
    #allocation10 [shape = 'u8[16384]{0}', space=vmem, size = 0x4000, scoped, tag = 'input window, operand 5, single buffered']
    #allocation11 [shape = 'u8[16384]{0}', space=vmem, size = 0x4000, scoped, tag = 'input window, operand 7, single buffered']
    #allocation12 [shape = 's32[1]{0}', space=sflag, size = 0x4, scoped, tag = 'scoped memory for tpu_custom_call.1']
    #allocation13 [shape = 'u8[512]{0}', space=vmem, size = 0x400, scoped, tag = 'input window, operand 8, single buffered']
    #allocation14 [shape = 'u8[8192]{0}', space=vmem, size = 0x2000, scoped, tag = 'output window, operand 0']
    %16 = vsyncpa [#allocation3], 0
    %s17 = scalar_lea.sflag [#allocation3], 1
    %18 = vsyncpa %s17, 0
    %19 = vsyncpa [#allocation6], 0
    %s20 = scalar_lea.sflag [#allocation6], 1
    %21 = vsyncpa %s20, 0
    %22 = vsyncpa [#allocation9], 0
    %23 = vsyncpa [#allocation12], 0
    %24 = vsyncpa [#allocation4], 0
    %s25 = scalar_lea.sflag [#allocation4], 1
    %26 = vsyncpa %s25, 0
    loop: start=0, step=1, limit=4
    $region2: #{tpu_custom_call.1} parent=1 // loop_pre_header
      _
    $region3: #{tpu_custom_call.1} parent=1 // loop_header
      %s28 = sphi 0, %s32
      %p29 = scmp.ge.s32.totalorder %s28, 4
      %s38 = sphi 0, %s40
      %s41 = sphi 0, %s38
      %s42 = sphi 0, %s41
      %s58 = sphi 0, %s42
      %s64 = sphi 0, %s66
      %s67 = sphi 0, %s64
      %s68 = sphi 0, %s67
      %s84 = sphi 0, %s68
      %s90 = sphi 0, %s92
      %s93 = sphi 0, %s90
      %s94 = sphi 0, %s93
      %s110 = sphi 0, %s94
      %s114 = sphi 0, %s114
      %s116 = sphi 0, %s114
      %s117 = sphi 0, %s116
      %s131 = sphi 0, %s117
      %s135 = sphi 0, %s135
      %s137 = sphi 0, %s135
      %s138 = sphi 0, %s137
      %s152 = sphi 0, %s138
      %s156 = sphi 0, %s156
      %s158 = sphi 0, %s156
      %s159 = sphi 0, %s158
      %s173 = sphi 0, %s159
      %s177 = sphi 0, %s177
      %s179 = sphi 0, %s177
      %s180 = sphi 0, %s179
      %s194 = sphi 0, %s180
      %s198 = sphi 0, %s198
      %s200 = sphi 0, %s198
      %s201 = sphi 0, %s200
      %s215 = sphi 0, %s201
      %s219 = sphi 0, %s219
      %s221 = sphi 0, %s219
      %s222 = sphi 0, %s221
      %s236 = sphi 0, %s222
      %s240 = sphi 0, %s240
      %s242 = sphi 0, %s240
      %s243 = sphi 0, %s242
      %s257 = sphi 0, %s243
      %s261 = sphi 0, %s261
      %s263 = sphi 0, %s261
      %s264 = sphi 0, %s263
      %s278 = sphi 0, %s264
      %s284 = sphi 0, %s286
      %s287 = sphi 0, %s284
      %s288 = sphi 0, %s287
      %s304 = sphi 0, %s288
    $region4: #{tpu_custom_call.1} parent=1 // loop_header_branch
      %31 = sbr.rel (%p29) target = $region8
    $region5: #{tpu_custom_call.1} parent=1 // loop_body
      %s33 = ssub.s32 %s28, 1
      %s34 = ssub.s32 %s28, 2
      %s35 = sadd.s32 %s28, 1
      %s36 = ssub.s32 %s28, %s35
      %p37 = scmp.eq.s32.totalorder %s36, 0
      %s39 = sadd.s32 %s38, 1
      %s40 = scalar_select %p37, %s38, %s39
      %p43 = pneg %p37
      %p44 = scmp.eq.s32.totalorder %s28, 1
      %p45 = por %p43, %p44
      %p46 = scmp.ne.s32.totalorder %s38, %s41
      %p47 = scmp.eq.s32.totalorder %s28, 0
      %p48 = por %p46, %p47
      %p49 = scmp.ne.s32.totalorder %s38, %s41
      %p50 = scmp.eq.s32.totalorder %s33, 1
      %p51 = por %p49, %p50
      %p52 = scmp.ne.s32.totalorder %s41, %s42
      %p53 = scmp.eq.s32.totalorder %s33, 0
      %p54 = por %p52, %p53
      %p55 = scmp.ne.s32.totalorder %s41, %s42
      %p56 = scmp.eq.s32.totalorder %s34, 1
      %p57 = por %p55, %p56
      %p59 = scmp.ne.s32.totalorder %s42, %s58
      %p60 = scmp.eq.s32.totalorder %s34, 0
      %p61 = por %p59, %p60
      %s62 = ssub.s32 %s28, %s35
      %p63 = scmp.eq.s32.totalorder %s62, 0
      %s65 = sadd.s32 %s64, 1
      %s66 = scalar_select %p63, %s64, %s65
      %p69 = pneg %p63
      %p70 = scmp.eq.s32.totalorder %s28, 1
      %p71 = por %p69, %p70
      %p72 = scmp.ne.s32.totalorder %s64, %s67
      %p73 = scmp.eq.s32.totalorder %s28, 0
      %p74 = por %p72, %p73
      %p75 = scmp.ne.s32.totalorder %s64, %s67
      %p76 = scmp.eq.s32.totalorder %s33, 1
      %p77 = por %p75, %p76
      %p78 = scmp.ne.s32.totalorder %s67, %s68
      %p79 = scmp.eq.s32.totalorder %s33, 0
      %p80 = por %p78, %p79
      %p81 = scmp.ne.s32.totalorder %s67, %s68
      %p82 = scmp.eq.s32.totalorder %s34, 1
      %p83 = por %p81, %p82
      %p85 = scmp.ne.s32.totalorder %s68, %s84
      %p86 = scmp.eq.s32.totalorder %s34, 0
      %p87 = por %p85, %p86
      %s88 = ssub.s32 %s28, %s35
      %p89 = scmp.eq.s32.totalorder %s88, 0
      %s91 = sadd.s32 %s90, 1
      %s92 = scalar_select %p89, %s90, %s91
      %p95 = pneg %p89
      %p96 = scmp.eq.s32.totalorder %s28, 1
      %p97 = por %p95, %p96
      %p98 = scmp.ne.s32.totalorder %s90, %s93
      %p99 = scmp.eq.s32.totalorder %s28, 0
      %p100 = por %p98, %p99
      %p101 = scmp.ne.s32.totalorder %s90, %s93
      %p102 = scmp.eq.s32.totalorder %s33, 1
      %p103 = por %p101, %p102
      %p104 = scmp.ne.s32.totalorder %s93, %s94
      %p105 = scmp.eq.s32.totalorder %s33, 0
      %p106 = por %p104, %p105
      %p107 = scmp.ne.s32.totalorder %s93, %s94
      %p108 = scmp.eq.s32.totalorder %s34, 1
      %p109 = por %p107, %p108
      %p111 = scmp.ne.s32.totalorder %s94, %s110
      %p112 = scmp.eq.s32.totalorder %s34, 0
      %p113 = por %p111, %p112
      %s115 = sadd.s32 %s114, 1
      %p118 = scmp.eq.s32.totalorder %s28, 1
      %p119 = scmp.ne.s32.totalorder %s114, %s116
      %p120 = scmp.eq.s32.totalorder %s28, 0
      %p121 = por %p119, %p120
      %p122 = scmp.ne.s32.totalorder %s114, %s116
      %p123 = scmp.eq.s32.totalorder %s33, 1
      %p124 = por %p122, %p123
      %p125 = scmp.ne.s32.totalorder %s116, %s117
      %p126 = scmp.eq.s32.totalorder %s33, 0
      %p127 = por %p125, %p126
      %p128 = scmp.ne.s32.totalorder %s116, %s117
      %p129 = scmp.eq.s32.totalorder %s34, 1
      %p130 = por %p128, %p129
      %p132 = scmp.ne.s32.totalorder %s117, %s131
      %p133 = scmp.eq.s32.totalorder %s34, 0
      %p134 = por %p132, %p133
      %s136 = sadd.s32 %s135, 1
      %p139 = scmp.eq.s32.totalorder %s28, 1
      %p140 = scmp.ne.s32.totalorder %s135, %s137
      %p141 = scmp.eq.s32.totalorder %s28, 0
      %p142 = por %p140, %p141
      %p143 = scmp.ne.s32.totalorder %s135, %s137
      %p144 = scmp.eq.s32.totalorder %s33, 1
      %p145 = por %p143, %p144
      %p146 = scmp.ne.s32.totalorder %s137, %s138
      %p147 = scmp.eq.s32.totalorder %s33, 0
      %p148 = por %p146, %p147
      %p149 = scmp.ne.s32.totalorder %s137, %s138
      %p150 = scmp.eq.s32.totalorder %s34, 1
      %p151 = por %p149, %p150
      %p153 = scmp.ne.s32.totalorder %s138, %s152
      %p154 = scmp.eq.s32.totalorder %s34, 0
      %p155 = por %p153, %p154
      %s157 = sadd.s32 %s156, 1
      %p160 = scmp.eq.s32.totalorder %s28, 1
      %p161 = scmp.ne.s32.totalorder %s156, %s158
      %p162 = scmp.eq.s32.totalorder %s28, 0
      %p163 = por %p161, %p162
      %p164 = scmp.ne.s32.totalorder %s156, %s158
      %p165 = scmp.eq.s32.totalorder %s33, 1
      %p166 = por %p164, %p165
      %p167 = scmp.ne.s32.totalorder %s158, %s159
      %p168 = scmp.eq.s32.totalorder %s33, 0
      %p169 = por %p167, %p168
      %p170 = scmp.ne.s32.totalorder %s158, %s159
      %p171 = scmp.eq.s32.totalorder %s34, 1
      %p172 = por %p170, %p171
      %p174 = scmp.ne.s32.totalorder %s159, %s173
      %p175 = scmp.eq.s32.totalorder %s34, 0
      %p176 = por %p174, %p175
      %s178 = sadd.s32 %s177, 1
      %p181 = scmp.eq.s32.totalorder %s28, 1
      %p182 = scmp.ne.s32.totalorder %s177, %s179
      %p183 = scmp.eq.s32.totalorder %s28, 0
      %p184 = por %p182, %p183
      %p185 = scmp.ne.s32.totalorder %s177, %s179
      %p186 = scmp.eq.s32.totalorder %s33, 1
      %p187 = por %p185, %p186
      %p188 = scmp.ne.s32.totalorder %s179, %s180
      %p189 = scmp.eq.s32.totalorder %s33, 0
      %p190 = por %p188, %p189
      %p191 = scmp.ne.s32.totalorder %s179, %s180
      %p192 = scmp.eq.s32.totalorder %s34, 1
      %p193 = por %p191, %p192
      %p195 = scmp.ne.s32.totalorder %s180, %s194
      %p196 = scmp.eq.s32.totalorder %s34, 0
      %p197 = por %p195, %p196
      %s199 = sadd.s32 %s198, 1
      %p202 = scmp.eq.s32.totalorder %s28, 1
      %p203 = scmp.ne.s32.totalorder %s198, %s200
      %p204 = scmp.eq.s32.totalorder %s28, 0
      %p205 = por %p203, %p204
      %p206 = scmp.ne.s32.totalorder %s198, %s200
      %p207 = scmp.eq.s32.totalorder %s33, 1
      %p208 = por %p206, %p207
      %p209 = scmp.ne.s32.totalorder %s200, %s201
      %p210 = scmp.eq.s32.totalorder %s33, 0
      %p211 = por %p209, %p210
      %p212 = scmp.ne.s32.totalorder %s200, %s201
      %p213 = scmp.eq.s32.totalorder %s34, 1
      %p214 = por %p212, %p213
      %p216 = scmp.ne.s32.totalorder %s201, %s215
      %p217 = scmp.eq.s32.totalorder %s34, 0
      %p218 = por %p216, %p217
      %s220 = sadd.s32 %s219, 1
      %p223 = scmp.eq.s32.totalorder %s28, 1
      %p224 = scmp.ne.s32.totalorder %s219, %s221
      %p225 = scmp.eq.s32.totalorder %s28, 0
      %p226 = por %p224, %p225
      %p227 = scmp.ne.s32.totalorder %s219, %s221
      %p228 = scmp.eq.s32.totalorder %s33, 1
      %p229 = por %p227, %p228
      %p230 = scmp.ne.s32.totalorder %s221, %s222
      %p231 = scmp.eq.s32.totalorder %s33, 0
      %p232 = por %p230, %p231
      %p233 = scmp.ne.s32.totalorder %s221, %s222
      %p234 = scmp.eq.s32.totalorder %s34, 1
      %p235 = por %p233, %p234
      %p237 = scmp.ne.s32.totalorder %s222, %s236
      %p238 = scmp.eq.s32.totalorder %s34, 0
      %p239 = por %p237, %p238
      %s241 = sadd.s32 %s240, 1
      %p244 = scmp.eq.s32.totalorder %s28, 1
      %p245 = scmp.ne.s32.totalorder %s240, %s242
      %p246 = scmp.eq.s32.totalorder %s28, 0
      %p247 = por %p245, %p246
      %p248 = scmp.ne.s32.totalorder %s240, %s242
      %p249 = scmp.eq.s32.totalorder %s33, 1
      %p250 = por %p248, %p249
      %p251 = scmp.ne.s32.totalorder %s242, %s243
      %p252 = scmp.eq.s32.totalorder %s33, 0
      %p253 = por %p251, %p252
      %p254 = scmp.ne.s32.totalorder %s242, %s243
      %p255 = scmp.eq.s32.totalorder %s34, 1
      %p256 = por %p254, %p255
      %p258 = scmp.ne.s32.totalorder %s243, %s257
      %p259 = scmp.eq.s32.totalorder %s34, 0
      %p260 = por %p258, %p259
      %s262 = sadd.s32 %s261, 1
      %p265 = scmp.eq.s32.totalorder %s28, 1
      %p266 = scmp.ne.s32.totalorder %s261, %s263
      %p267 = scmp.eq.s32.totalorder %s28, 0
      %p268 = por %p266, %p267
      %p269 = scmp.ne.s32.totalorder %s261, %s263
      %p270 = scmp.eq.s32.totalorder %s33, 1
      %p271 = por %p269, %p270
      %p272 = scmp.ne.s32.totalorder %s263, %s264
      %p273 = scmp.eq.s32.totalorder %s33, 0
      %p274 = por %p272, %p273
      %p275 = scmp.ne.s32.totalorder %s263, %s264
      %p276 = scmp.eq.s32.totalorder %s34, 1
      %p277 = por %p275, %p276
      %p279 = scmp.ne.s32.totalorder %s264, %s278
      %p280 = scmp.eq.s32.totalorder %s34, 0
      %p281 = por %p279, %p280
      %s282 = ssub.s32 %s28, %s35
      %p283 = scmp.eq.s32.totalorder %s282, 0
      %s285 = sadd.s32 %s284, 1
      %s286 = scalar_select %p283, %s284, %s285
      %p289 = pneg %p283
      %p290 = scmp.eq.s32.totalorder %s28, 1
      %p291 = por %p289, %p290
      %p292 = scmp.ne.s32.totalorder %s284, %s287
      %p293 = scmp.eq.s32.totalorder %s28, 0
      %p294 = por %p292, %p293
      %p295 = scmp.ne.s32.totalorder %s284, %s287
      %p296 = scmp.eq.s32.totalorder %s33, 1
      %p297 = por %p295, %p296
      %p298 = scmp.ne.s32.totalorder %s287, %s288
      %p299 = scmp.eq.s32.totalorder %s33, 0
      %p300 = por %p298, %p299
      %p301 = scmp.ne.s32.totalorder %s287, %s288
      %p302 = scmp.eq.s32.totalorder %s34, 1
      %p303 = por %p301, %p302
      %p305 = scmp.ne.s32.totalorder %s288, %s304
      %p306 = scmp.eq.s32.totalorder %s34, 0
      %p307 = por %p305, %p306
      %p308 = scmp.le.s32.totalorder 1, %s28
      %p309 = scmp.lt.s32.totalorder %s28, 3
      %p310 = pnand %p308, %p309
      %p311 = pneg %p310
      // Predicated region
      $region9: #{tpu_custom_call.1} parent=5 // pred_check
        _
      $region10: #{tpu_custom_call.1} parent=5 // pred_check_branch
        %313 = sbr.rel (%p310) target = $region12
      $region11: #{tpu_custom_call.1} parent=5 // pred_region
        %s314 = ssub.s32 %s28, 1
        // Predicated region
        $region13: #{tpu_custom_call.1} parent=11 // pred_check
          %p315 = pneg %p127
        $region14: #{tpu_custom_call.1} parent=11 // pred_check_branch
          %317 = sbr.rel (%p315) target = $region16
        $region15: #{tpu_custom_call.1} parent=11 // pred_region
          %s319 = ssub.s32 512, 512
          %320 = vsyncadd [#allocation9], %s319
          %s321 = sshll.u32 [#allocation8], 4
          %s322 = int_to_ptr.vmem [resolvable:$true] %s321
          %327 = dma.hbm_to_vmem [thread:$0]  %s3, 512, %s322, [#allocation9], 128, 128, 8
        $region16: #{tpu_custom_call.1} parent=11 // pred_fallthru
          _
        // Predicated region
        $region17: #{tpu_custom_call.1} parent=11 // pred_check
          %p328 = pneg %p148
        $region18: #{tpu_custom_call.1} parent=11 // pred_check_branch
          %330 = sbr.rel (%p328) target = $region20
        $region19: #{tpu_custom_call.1} parent=11 // pred_region
          _
        $region20: #{tpu_custom_call.1} parent=11 // pred_fallthru
          _
        // Predicated region
        $region21: #{tpu_custom_call.1} parent=11 // pred_check
          %p331 = pneg %p169
        $region22: #{tpu_custom_call.1} parent=11 // pred_check_branch
          %333 = sbr.rel (%p331) target = $region24
        $region23: #{tpu_custom_call.1} parent=11 // pred_region
          %s335 = ssub.s32 512, 512
          %336 = vsyncadd [#allocation9], %s335
          %s337 = sshll.u32 [#allocation10], 4
          %s338 = int_to_ptr.vmem [resolvable:$true] %s337
          %343 = dma.hbm_to_vmem [thread:$0]  %s5, 512, %s338, [#allocation9], 128, 128, 8
        $region24: #{tpu_custom_call.1} parent=11 // pred_fallthru
          _
        // Predicated region
        $region25: #{tpu_custom_call.1} parent=11 // pred_check
          %p344 = pneg %p190
        $region26: #{tpu_custom_call.1} parent=11 // pred_check_branch
          %346 = sbr.rel (%p344) target = $region28
        $region27: #{tpu_custom_call.1} parent=11 // pred_region
          _
        $region28: #{tpu_custom_call.1} parent=11 // pred_fallthru
          _
        // Predicated region
        $region29: #{tpu_custom_call.1} parent=11 // pred_check
          %p347 = pneg %p211
        $region30: #{tpu_custom_call.1} parent=11 // pred_check_branch
          %349 = sbr.rel (%p347) target = $region32
        $region31: #{tpu_custom_call.1} parent=11 // pred_region
          %s351 = ssub.s32 512, 512
          %352 = vsyncadd [#allocation12], %s351
          %s353 = sshll.u32 [#allocation11], 4
          %s354 = int_to_ptr.vmem [resolvable:$true] %s353
          %359 = dma.hbm_to_vmem [thread:$0]  %s7, 512, %s354, [#allocation12], 128, 128, 8
        $region32: #{tpu_custom_call.1} parent=11 // pred_fallthru
          _
        // Predicated region
        $region33: #{tpu_custom_call.1} parent=11 // pred_check
          %p360 = pneg %p232
        $region34: #{tpu_custom_call.1} parent=11 // pred_check_branch
          %362 = sbr.rel (%p360) target = $region36
        $region35: #{tpu_custom_call.1} parent=11 // pred_region
          %s364 = ssub.s32 16, 16
          %365 = vsyncadd [#allocation12], %s364
          %s367 = sshll.u32 [#allocation13], 4
          %s368 = int_to_ptr.vmem [resolvable:$true] %s367
          %370 = dma.hbm_to_vmem [thread:$0]  %s8, 16, %s368, [#allocation12]
        $region36: #{tpu_custom_call.1} parent=11 // pred_fallthru
          _
        // Predicated region
        $region37: #{tpu_custom_call.1} parent=11 // pred_check
          %p371 = pneg %p253
        $region38: #{tpu_custom_call.1} parent=11 // pred_check_branch
          %373 = sbr.rel (%p371) target = $region40
        $region39: #{tpu_custom_call.1} parent=11 // pred_region
          _
        $region40: #{tpu_custom_call.1} parent=11 // pred_fallthru
          _
        // Predicated region
        $region41: #{tpu_custom_call.1} parent=11 // pred_check
          %p374 = pneg %p274
        $region42: #{tpu_custom_call.1} parent=11 // pred_check_branch
          %376 = sbr.rel (%p374) target = $region44
        $region43: #{tpu_custom_call.1} parent=11 // pred_region
          _
        $region44: #{tpu_custom_call.1} parent=11 // pred_fallthru
          _
      $region12: #{tpu_custom_call.1} parent=5 // pred_fallthru
        _
      %p377 = scmp.lt.s32.totalorder %s28, 2
      // Predicated region
      $region45: #{tpu_custom_call.1} parent=5 // pred_check
        %p378 = pneg %p377
      $region46: #{tpu_custom_call.1} parent=5 // pred_check_branch
        %380 = sbr.rel (%p378) target = $region48
      $region47: #{tpu_custom_call.1} parent=5 // pred_region
        // Predicated region
        $region49: #{tpu_custom_call.1} parent=47 // pred_check
          %p381 = pneg %p48
        $region50: #{tpu_custom_call.1} parent=47 // pred_check_branch
          %383 = sbr.rel (%p381) target = $region52
        $region51: #{tpu_custom_call.1} parent=47 // pred_region
          %s384 = sand.u32 %s38, 1
          %s385 = scalar_lea.sflag [#allocation3], %s384
          %s386 = sand.u32 %s38, 1
          %s387 = smul.addr %s386, 8
          %s388 = scalar_lea.vmem [#allocation2], %s387
          %s390 = ssub.s32 128, 128
          %391 = vsyncadd %s385, %s390
          %s392 = smul.addr %s28, 128
          %s393 = scalar_lea.hbm %s0, %s392
          %s395 = sshll.u32 %s388, 4
          %s396 = int_to_ptr.vmem [resolvable:$true] %s395
          %398 = dma.hbm_to_vmem [thread:$0]  %s393, 128, %s396, %s385
        $region52: #{tpu_custom_call.1} parent=47 // pred_fallthru
          _
        // Predicated region
        $region53: #{tpu_custom_call.1} parent=47 // pred_check
          %p399 = pneg %p74
        $region54: #{tpu_custom_call.1} parent=47 // pred_check_branch
          %401 = sbr.rel (%p399) target = $region56
        $region55: #{tpu_custom_call.1} parent=47 // pred_region
          %s402 = sand.u32 %s28, 1
          %s403 = scalar_lea.sflag [#allocation6], %s402
          %s404 = sand.u32 %s64, 1
          %s405 = smul.addr %s404, 8
          %s406 = scalar_lea.vmem [#allocation5], %s405
          %s408 = ssub.s32 128, 128
          %409 = vsyncadd %s403, %s408
          %s410 = smul.addr %s28, 128
          %s411 = scalar_lea.hbm %s1, %s410
          %s413 = sshll.u32 %s406, 4
          %s414 = int_to_ptr.vmem [resolvable:$true] %s413
          %416 = dma.hbm_to_vmem [thread:$0]  %s411, 128, %s414, %s403
        $region56: #{tpu_custom_call.1} parent=47 // pred_fallthru
          _
        // Predicated region
        $region57: #{tpu_custom_call.1} parent=47 // pred_check
          %p417 = pneg %p100
        $region58: #{tpu_custom_call.1} parent=47 // pred_check_branch
          %419 = sbr.rel (%p417) target = $region60
        $region59: #{tpu_custom_call.1} parent=47 // pred_region
          %s420 = sand.u32 %s28, 1
          %s421 = scalar_lea.sflag [#allocation6], %s420
          %s422 = sand.u32 %s90, 1
          %s423 = smul.addr %s422, 8
          %s424 = scalar_lea.vmem [#allocation7], %s423
          %s426 = ssub.s32 128, 128
          %427 = vsyncadd %s421, %s426
          %s428 = smul.addr %s28, 128
          %s429 = scalar_lea.hbm %s2, %s428
          %s431 = sshll.u32 %s424, 4
          %s432 = int_to_ptr.vmem [resolvable:$true] %s431
          %434 = dma.hbm_to_vmem [thread:$0]  %s429, 128, %s432, %s421
        $region60: #{tpu_custom_call.1} parent=47 // pred_fallthru
          _
      $region48: #{tpu_custom_call.1} parent=5 // pred_fallthru
        _
      %p435 = scmp.le.s32.totalorder 1, %s28
      %p436 = scmp.lt.s32.totalorder %s28, 3
      %p437 = pnand %p435, %p436
      %p438 = pneg %p437
      // Predicated region
      $region61: #{tpu_custom_call.1} parent=5 // pred_check
        _
      $region62: #{tpu_custom_call.1} parent=5 // pred_check_branch
        %440 = sbr.rel (%p437) target = $region64
      $region63: #{tpu_custom_call.1} parent=5 // pred_region
        %s441 = ssub.s32 %s28, 1
        %s442 = sand.u32 %s41, 1
        %s443 = scalar_lea.sflag [#allocation3], %s442
        %s444 = sand.u32 %s41, 1
        %s445 = smul.addr %s444, 8
        %s446 = scalar_lea.vmem [#allocation2], %s445
        // Predicated region
        $region65: #{tpu_custom_call.1} parent=63 // pred_check
          %p447 = pneg %p54
        $region66: #{tpu_custom_call.1} parent=63 // pred_check_branch
          %449 = sbr.rel (%p447) target = $region68
        $region67: #{tpu_custom_call.1} parent=63 // pred_region
          %450 = dma.done %s443, 128
        $region68: #{tpu_custom_call.1} parent=63 // pred_fallthru
          _
        %s451 = sand.u32 %s33, 1
        %s452 = scalar_lea.sflag [#allocation6], %s451
        %s453 = sand.u32 %s67, 1
        %s454 = smul.addr %s453, 8
        %s455 = scalar_lea.vmem [#allocation5], %s454
        // Predicated region
        $region69: #{tpu_custom_call.1} parent=63 // pred_check
          %p456 = pneg %p80
        $region70: #{tpu_custom_call.1} parent=63 // pred_check_branch
          %458 = sbr.rel (%p456) target = $region72
        $region71: #{tpu_custom_call.1} parent=63 // pred_region
          %459 = dma.done %s452, 128
        $region72: #{tpu_custom_call.1} parent=63 // pred_fallthru
          _
        %s460 = sand.u32 %s33, 1
        %s461 = scalar_lea.sflag [#allocation6], %s460
        %s462 = sand.u32 %s93, 1
        %s463 = smul.addr %s462, 8
        %s464 = scalar_lea.vmem [#allocation7], %s463
        // Predicated region
        $region73: #{tpu_custom_call.1} parent=63 // pred_check
          %p465 = pneg %p106
        $region74: #{tpu_custom_call.1} parent=63 // pred_check_branch
          %467 = sbr.rel (%p465) target = $region76
        $region75: #{tpu_custom_call.1} parent=63 // pred_region
          %468 = dma.done %s461, 128
        $region76: #{tpu_custom_call.1} parent=63 // pred_fallthru
          _
        // Predicated region
        $region77: #{tpu_custom_call.1} parent=63 // pred_check
          %p469 = pneg %p127
        $region78: #{tpu_custom_call.1} parent=63 // pred_check_branch
          %471 = sbr.rel (%p469) target = $region80
        $region79: #{tpu_custom_call.1} parent=63 // pred_region
          %472 = dma.done [#allocation9], 512
        $region80: #{tpu_custom_call.1} parent=63 // pred_fallthru
          _
        // Predicated region
        $region81: #{tpu_custom_call.1} parent=63 // pred_check
          %p473 = pneg %p169
        $region82: #{tpu_custom_call.1} parent=63 // pred_check_branch
          %475 = sbr.rel (%p473) target = $region84
        $region83: #{tpu_custom_call.1} parent=63 // pred_region
          %476 = dma.done [#allocation9], 512
        $region84: #{tpu_custom_call.1} parent=63 // pred_fallthru
          _
        // Predicated region
        $region85: #{tpu_custom_call.1} parent=63 // pred_check
          %p477 = pneg %p211
        $region86: #{tpu_custom_call.1} parent=63 // pred_check_branch
          %479 = sbr.rel (%p477) target = $region88
        $region87: #{tpu_custom_call.1} parent=63 // pred_region
          %480 = dma.done [#allocation12], 512
        $region88: #{tpu_custom_call.1} parent=63 // pred_fallthru
          _
        // Predicated region
        $region89: #{tpu_custom_call.1} parent=63 // pred_check
          %p481 = pneg %p232
        $region90: #{tpu_custom_call.1} parent=63 // pred_check_branch
          %483 = sbr.rel (%p481) target = $region92
        $region91: #{tpu_custom_call.1} parent=63 // pred_region
          %484 = dma.done [#allocation12], 16
        $region92: #{tpu_custom_call.1} parent=63 // pred_fallthru
          _
        %s485 = sand.u32 %s41, 1
        %s486 = scalar_lea.sflag [#allocation3], %s485
        %s487 = sand.u32 %s41, 1
        %s488 = smul.addr %s487, 8
        %s489 = scalar_lea.vmem [#allocation2], %s488
        %p490 = pneg %p54
        %p491 = pneg %p51
        %s492 = sand.u32 %s33, 1
        %s493 = scalar_lea.sflag [#allocation6], %s492
        %s494 = sand.u32 %s67, 1
        %s495 = smul.addr %s494, 8
        %s496 = scalar_lea.vmem [#allocation5], %s495
        %p497 = pneg %p80
        %p498 = pneg %p77
        %s499 = sand.u32 %s33, 1
        %s500 = scalar_lea.sflag [#allocation6], %s499
        %s501 = sand.u32 %s93, 1
        %s502 = smul.addr %s501, 8
        %s503 = scalar_lea.vmem [#allocation7], %s502
        %p504 = pneg %p106
        %p505 = pneg %p103
        %p506 = pneg %p127
        %p507 = pneg %p124
        %p508 = pneg %p148
        %p509 = pneg %p145
        %p510 = pneg %p169
        %p511 = pneg %p166
        %p512 = pneg %p190
        %p513 = pneg %p187
        %p514 = pneg %p211
        %p515 = pneg %p208
        %p516 = pneg %p232
        %p517 = pneg %p229
        %p518 = pneg %p253
        %p519 = pneg %p250
        %p520 = pneg %p274
        %p521 = pneg %p271
        %p522 = pneg %p300
        %p523 = pneg %p297
        %s524 = sand.u32 %s287, 1
        %s525 = scalar_lea.sflag [#allocation4], %s524
        %s526 = sand.u32 %s287, 1
        %s527 = smul.addr %s526, 8
        %s528 = scalar_lea.vmem [#allocation14], %s527
        %v529 = vld [vmem:[%s446] sm:$0xff]
        %v530 = vld [vmem:[%s455] sm:$0xff]
        %v531 = vld [vmem:[%s464] sm:$0xff]
        %v532 = vld [vmem:[#allocation8] sm:$0xff]
        %v533 = vld [vmem:[#allocation8 + $0x8] sm:$0xff]
        %v534 = vld [vmem:[#allocation8 + $0x10] sm:$0xff]
        %v535 = vld [vmem:[#allocation8 + $0x18] sm:$0xff]
        %v536 = vld [vmem:[%s4] sm:$0x1]
        %v538 = vlaneseq
        %v539 = vshrl.u32 %v538, 7
        %v540 = vsub.s32 0, %v539
        %v541 = vrot.slane %v536, %v540
        %vm543 = vcmask 261120
        %v545 = vsel %vm543, %v529, 0
        %547 = vmatprep.subr.mxu0 0.0
        %548 = vmatpush1.msra.mxu0 %v532
        %549 = vmatprep.subr.mxu0 0.0
        %550 = vmatpush1.msra.mxu0 %v533
        %551 = vmatprep.subr.mxu0 0.0
        %552 = vmatpush1.msra.mxu0 %v534
        %553 = vmatprep.subr.mxu0 0.0
        %554 = vmatpush1.msra.mxu0 %v535
        %555 = vmatprep.subr.mxu0 0.0
        %556 = vmatpush1.msra.mxu0 0.0
        %557 = vmatprep.subr.mxu0 0.0
        %558 = vmatpush1.msra.mxu0 0.0
        %559 = vmatprep.subr.mxu0 0.0
        %560 = vmatpush1.msra.mxu0 0.0
        %561 = vmatprep.subr.mxu0 0.0
        %562 = vmatpush1.msra.mxu0 0.0
        %563 = vmatprep.subr.mxu0 0.0
        %564 = vmatpush1.msra.mxu0 0.0
        %565 = vmatprep.subr.mxu0 0.0
        %566 = vmatpush1.msra.mxu0 0.0
        %567 = vmatprep.subr.mxu0 0.0
        %568 = vmatpush1.msra.mxu0 0.0
        %569 = vmatprep.subr.mxu0 0.0
        %570 = vmatpush1.msra.mxu0 0.0
        %571 = vmatprep.subr.mxu0 0.0
        %572 = vmatpush1.msra.mxu0 0.0
        %573 = vmatprep.subr.mxu0 0.0
        %574 = vmatpush1.msra.mxu0 0.0
        %575 = vmatprep.subr.mxu0 0.0
        %576 = vmatpush1.msra.mxu0 0.0
        %577 = vmatprep.subr.mxu0 0.0
        %578 = vmatpush1.msra.mxu0 0.0
        %579 = vmatprep.subr.mxu0 0.0
        %580 = vmatpush1.msra.mxu0 0.0
        %581 = vmatprep.subr.mxu0 0.0
        %582 = vmatpush1.msra.mxu0 0.0
        %583 = vmatprep.subr.mxu0 0.0
        %584 = vmatpush1.msra.mxu0 0.0
        %585 = vmatprep.subr.mxu0 0.0
        %586 = vmatpush1.msra.mxu0 0.0
        %587 = vmatprep.subr.mxu0 0.0
        %588 = vmatpush1.msra.mxu0 0.0
        %589 = vmatprep.subr.mxu0 0.0
        %590 = vmatpush1.msra.mxu0 0.0
        %591 = vmatprep.subr.mxu0 0.0
        %592 = vmatpush1.msra.mxu0 0.0
        %593 = vmatprep.subr.mxu0 0.0
        %594 = vmatpush1.msra.mxu0 0.0
        %595 = vmatprep.subr.mxu0 0.0
        %596 = vmatpush1.msra.mxu0 0.0
        %597 = vmatprep.subr.mxu0 0.0
        %598 = vmatpush1.msra.mxu0 0.0
        %599 = vmatprep.subr.mxu0 0.0
        %600 = vmatpush1.msra.mxu0 0.0
        %601 = vmatprep.subr.mxu0 0.0
        %602 = vmatpush1.msra.mxu0 0.0
        %603 = vmatprep.subr.mxu0 0.0
        %604 = vmatpush1.msra.mxu0 0.0
        %605 = vmatprep.subr.mxu0 0.0
        %606 = vmatpush1.msra.mxu0 0.0
        %607 = vmatprep.subr.mxu0 0.0
        %608 = vmatpush1.msra.mxu0 0.0
        %609 = vmatprep.subr.mxu0 0.0
        %610 = vmatpush1.msra.mxu0 0.0
        %611 = vmatprep.mubr.f32.mxu0 0.0
        %612 = vmatmul.mubr.f32.gmra.mrb[0].mxu0 %v545
        %v613 = vpop.f32.mrb[0].mxu0
        %v614 = vadd.f32 %v541, %v613
        %v615 = vpop.f32.mrb[0].mxu0
        %616 = vdwg.mxu0
        %v617 = vld [vmem:[#allocation10] sm:$0xff]
        %v618 = vld [vmem:[#allocation10 + $0x8] sm:$0xff]
        %v619 = vld [vmem:[#allocation10 + $0x10] sm:$0xff]
        %v620 = vld [vmem:[#allocation10 + $0x18] sm:$0xff]
        %v621 = vld [vmem:[%s6] sm:$0x1]
        %v623 = vlaneseq
        %v624 = vshrl.u32 %v623, 7
        %v625 = vsub.s32 0, %v624
        %v626 = vrot.slane %v621, %v625
        %v629 = vsel %vm543, %v530, 0
        %631 = vmatprep.subr.mxu0 0.0
        %632 = vmatpush1.msra.mxu0 %v617
        %633 = vmatprep.subr.mxu0 0.0
        %634 = vmatpush1.msra.mxu0 %v618
        %635 = vmatprep.subr.mxu0 0.0
        %636 = vmatpush1.msra.mxu0 %v619
        %637 = vmatprep.subr.mxu0 0.0
        %638 = vmatpush1.msra.mxu0 %v620
        %639 = vmatprep.subr.mxu0 0.0
        %640 = vmatpush1.msra.mxu0 0.0
        %641 = vmatprep.subr.mxu0 0.0
        %642 = vmatpush1.msra.mxu0 0.0
        %643 = vmatprep.subr.mxu0 0.0
        %644 = vmatpush1.msra.mxu0 0.0
        %645 = vmatprep.subr.mxu0 0.0
        %646 = vmatpush1.msra.mxu0 0.0
        %647 = vmatprep.subr.mxu0 0.0
        %648 = vmatpush1.msra.mxu0 0.0
        %649 = vmatprep.subr.mxu0 0.0
        %650 = vmatpush1.msra.mxu0 0.0
        %651 = vmatprep.subr.mxu0 0.0
        %652 = vmatpush1.msra.mxu0 0.0
        %653 = vmatprep.subr.mxu0 0.0
        %654 = vmatpush1.msra.mxu0 0.0
        %655 = vmatprep.subr.mxu0 0.0
        %656 = vmatpush1.msra.mxu0 0.0
        %657 = vmatprep.subr.mxu0 0.0
        %658 = vmatpush1.msra.mxu0 0.0
        %659 = vmatprep.subr.mxu0 0.0
        %660 = vmatpush1.msra.mxu0 0.0
        %661 = vmatprep.subr.mxu0 0.0
        %662 = vmatpush1.msra.mxu0 0.0
        %663 = vmatprep.subr.mxu0 0.0
        %664 = vmatpush1.msra.mxu0 0.0
        %665 = vmatprep.subr.mxu0 0.0
        %666 = vmatpush1.msra.mxu0 0.0
        %667 = vmatprep.subr.mxu0 0.0
        %668 = vmatpush1.msra.mxu0 0.0
        %669 = vmatprep.subr.mxu0 0.0
        %670 = vmatpush1.msra.mxu0 0.0
        %671 = vmatprep.subr.mxu0 0.0
        %672 = vmatpush1.msra.mxu0 0.0
        %673 = vmatprep.subr.mxu0 0.0
        %674 = vmatpush1.msra.mxu0 0.0
        %675 = vmatprep.subr.mxu0 0.0
        %676 = vmatpush1.msra.mxu0 0.0
        %677 = vmatprep.subr.mxu0 0.0
        %678 = vmatpush1.msra.mxu0 0.0
        %679 = vmatprep.subr.mxu0 0.0
        %680 = vmatpush1.msra.mxu0 0.0
        %681 = vmatprep.subr.mxu0 0.0
        %682 = vmatpush1.msra.mxu0 0.0
        %683 = vmatprep.subr.mxu0 0.0
        %684 = vmatpush1.msra.mxu0 0.0
        %685 = vmatprep.subr.mxu0 0.0
        %686 = vmatpush1.msra.mxu0 0.0
        %687 = vmatprep.subr.mxu0 0.0
        %688 = vmatpush1.msra.mxu0 0.0
        %689 = vmatprep.subr.mxu0 0.0
        %690 = vmatpush1.msra.mxu0 0.0
        %691 = vmatprep.subr.mxu0 0.0
        %692 = vmatpush1.msra.mxu0 0.0
        %693 = vmatprep.subr.mxu0 0.0
        %694 = vmatpush1.msra.mxu0 0.0
        %695 = vmatprep.mubr.f32.mxu0 0.0
        %696 = vmatmul.mubr.f32.gmra.mrb[0].mxu0 %v629
        %v697 = vpop.f32.mrb[0].mxu0
        %v698 = vadd.f32 %v626, %v697
        %v699 = vpop.f32.mrb[0].mxu0
        %700 = vdwg.mxu0
        %v701 = vld [vmem:[#allocation11] sm:$0xff]
        %v702 = vld [vmem:[#allocation11 + $0x8] sm:$0xff]
        %v703 = vld [vmem:[#allocation11 + $0x10] sm:$0xff]
        %v704 = vld [vmem:[#allocation11 + $0x18] sm:$0xff]
        %v705 = vld [vmem:[#allocation13] sm:$0x1]
        %v707 = vlaneseq
        %v708 = vshrl.u32 %v707, 7
        %v709 = vsub.s32 0, %v708
        %v710 = vrot.slane %v705, %v709
        %v713 = vsel %vm543, %v531, 0
        %715 = vmatprep.subr.mxu0 0.0
        %716 = vmatpush1.msra.mxu0 %v701
        %717 = vmatprep.subr.mxu0 0.0
        %718 = vmatpush1.msra.mxu0 %v702
        %719 = vmatprep.subr.mxu0 0.0
        %720 = vmatpush1.msra.mxu0 %v703
        %721 = vmatprep.subr.mxu0 0.0
        %722 = vmatpush1.msra.mxu0 %v704
        %723 = vmatprep.subr.mxu0 0.0
        %724 = vmatpush1.msra.mxu0 0.0
        %725 = vmatprep.subr.mxu0 0.0
        %726 = vmatpush1.msra.mxu0 0.0
        %727 = vmatprep.subr.mxu0 0.0
        %728 = vmatpush1.msra.mxu0 0.0
        %729 = vmatprep.subr.mxu0 0.0
        %730 = vmatpush1.msra.mxu0 0.0
        %731 = vmatprep.subr.mxu0 0.0
        %732 = vmatpush1.msra.mxu0 0.0
        %733 = vmatprep.subr.mxu0 0.0
        %734 = vmatpush1.msra.mxu0 0.0
        %735 = vmatprep.subr.mxu0 0.0
        %736 = vmatpush1.msra.mxu0 0.0
        %737 = vmatprep.subr.mxu0 0.0
        %738 = vmatpush1.msra.mxu0 0.0
        %739 = vmatprep.subr.mxu0 0.0
        %740 = vmatpush1.msra.mxu0 0.0
        %741 = vmatprep.subr.mxu0 0.0
        %742 = vmatpush1.msra.mxu0 0.0
        %743 = vmatprep.subr.mxu0 0.0
        %744 = vmatpush1.msra.mxu0 0.0
        %745 = vmatprep.subr.mxu0 0.0
        %746 = vmatpush1.msra.mxu0 0.0
        %747 = vmatprep.subr.mxu0 0.0
        %748 = vmatpush1.msra.mxu0 0.0
        %749 = vmatprep.subr.mxu0 0.0
        %750 = vmatpush1.msra.mxu0 0.0
        %751 = vmatprep.subr.mxu0 0.0
        %752 = vmatpush1.msra.mxu0 0.0
        %753 = vmatprep.subr.mxu0 0.0
        %754 = vmatpush1.msra.mxu0 0.0
        %755 = vmatprep.subr.mxu0 0.0
        %756 = vmatpush1.msra.mxu0 0.0
        %757 = vmatprep.subr.mxu0 0.0
        %758 = vmatpush1.msra.mxu0 0.0
        %759 = vmatprep.subr.mxu0 0.0
        %760 = vmatpush1.msra.mxu0 0.0
        %761 = vmatprep.subr.mxu0 0.0
        %762 = vmatpush1.msra.mxu0 0.0
        %763 = vmatprep.subr.mxu0 0.0
        %764 = vmatpush1.msra.mxu0 0.0
        %765 = vmatprep.subr.mxu0 0.0
        %766 = vmatpush1.msra.mxu0 0.0
        %767 = vmatprep.subr.mxu0 0.0
        %768 = vmatpush1.msra.mxu0 0.0
        %769 = vmatprep.subr.mxu0 0.0
        %770 = vmatpush1.msra.mxu0 0.0
        %771 = vmatprep.subr.mxu0 0.0
        %772 = vmatpush1.msra.mxu0 0.0
        %773 = vmatprep.subr.mxu0 0.0
        %774 = vmatpush1.msra.mxu0 0.0
        %775 = vmatprep.subr.mxu0 0.0
        %776 = vmatpush1.msra.mxu0 0.0
        %777 = vmatprep.subr.mxu0 0.0
        %778 = vmatpush1.msra.mxu0 0.0
        %779 = vmatprep.mubr.f32.mxu0 0.0
        %780 = vmatmul.mubr.f32.gmra.mrb[0].mxu0 %v713
        %v781 = vpop.f32.mrb[0].mxu0
        %v782 = vadd.f32 %v710, %v781
        %v783 = vpop.f32.mrb[0].mxu0
        %784 = vdwg.mxu0
        %v786 = vsel %vm543, %v614, 0
        %v789 = vsel %vm543, %v698, 0
        %791 = vmatprep.subr.mxu0 0.0
        %792 = vmatpush1.xpose.msra.mxu0 %v789
        %793 = vmatprep.subr.mxu0 0.0
        %794 = vmatpush1.xpose.msra.mxu0 0.0
        %795 = vmatprep.subr.mxu0 0.0
        %796 = vmatpush1.xpose.msra.mxu0 0.0
        %797 = vmatprep.subr.mxu0 0.0
        %798 = vmatpush1.xpose.msra.mxu0 0.0
        %799 = vmatprep.subr.mxu0 0.0
        %800 = vmatpush1.xpose.msra.mxu0 0.0
        %801 = vmatprep.subr.mxu0 0.0
        %802 = vmatpush1.xpose.msra.mxu0 0.0
        %803 = vmatprep.subr.mxu0 0.0
        %804 = vmatpush1.xpose.msra.mxu0 0.0
        %805 = vmatprep.subr.mxu0 0.0
        %806 = vmatpush1.xpose.msra.mxu0 0.0
        %807 = vmatprep.subr.mxu0 0.0
        %808 = vmatpush1.xpose.msra.mxu0 0.0
        %809 = vmatprep.subr.mxu0 0.0
        %810 = vmatpush1.xpose.msra.mxu0 0.0
        %811 = vmatprep.subr.mxu0 0.0
        %812 = vmatpush1.xpose.msra.mxu0 0.0
        %813 = vmatprep.subr.mxu0 0.0
        %814 = vmatpush1.xpose.msra.mxu0 0.0
        %815 = vmatprep.subr.mxu0 0.0
        %816 = vmatpush1.xpose.msra.mxu0 0.0
        %817 = vmatprep.subr.mxu0 0.0
        %818 = vmatpush1.xpose.msra.mxu0 0.0
        %819 = vmatprep.subr.mxu0 0.0
        %820 = vmatpush1.xpose.msra.mxu0 0.0
        %821 = vmatprep.subr.mxu0 0.0
        %822 = vmatpush1.xpose.msra.mxu0 0.0
        %823 = vmatprep.subr.mxu0 0.0
        %824 = vmatpush1.xpose.msra.mxu0 0.0
        %825 = vmatprep.subr.mxu0 0.0
        %826 = vmatpush1.xpose.msra.mxu0 0.0
        %827 = vmatprep.subr.mxu0 0.0
        %828 = vmatpush1.xpose.msra.mxu0 0.0
        %829 = vmatprep.subr.mxu0 0.0
        %830 = vmatpush1.xpose.msra.mxu0 0.0
        %831 = vmatprep.subr.mxu0 0.0
        %832 = vmatpush1.xpose.msra.mxu0 0.0
        %833 = vmatprep.subr.mxu0 0.0
        %834 = vmatpush1.xpose.msra.mxu0 0.0
        %835 = vmatprep.subr.mxu0 0.0
        %836 = vmatpush1.xpose.msra.mxu0 0.0
        %837 = vmatprep.subr.mxu0 0.0
        %838 = vmatpush1.xpose.msra.mxu0 0.0
        %839 = vmatprep.subr.mxu0 0.0
        %840 = vmatpush1.xpose.msra.mxu0 0.0
        %841 = vmatprep.subr.mxu0 0.0
        %842 = vmatpush1.xpose.msra.mxu0 0.0
        %843 = vmatprep.subr.mxu0 0.0
        %844 = vmatpush1.xpose.msra.mxu0 0.0
        %845 = vmatprep.subr.mxu0 0.0
        %846 = vmatpush1.xpose.msra.mxu0 0.0
        %847 = vmatprep.subr.mxu0 0.0
        %848 = vmatpush1.xpose.msra.mxu0 0.0
        %849 = vmatprep.subr.mxu0 0.0
        %850 = vmatpush1.xpose.msra.mxu0 0.0
        %851 = vmatprep.subr.mxu0 0.0
        %852 = vmatpush1.xpose.msra.mxu0 0.0
        %853 = vmatprep.subr.mxu0 0.0
        %854 = vmatpush1.xpose.msra.mxu0 0.0
        %855 = vmatprep.mubr.f32.mxu0 0.0
        %856 = vmatmul.mubr.f32.gmra.mrb[0].mxu0 %v786
        %v857 = vpop.f32.mrb[0].mxu0
        %v858 = vadd.f32 0.0, %v857
        %v859 = vpop.f32.mrb[0].mxu0
        %860 = vdwg.mxu0
        %vm861 = vcmask 64512
        %v862 = vsel %vm861, %v858, -inf
        %863 = vmax.xlane.f32.xlu0 %v862
        %v864 = vpop.xlane.xlu0 %863
        %v865 = vsub.f32 %v858, %v864
        %v866 = vmul.f32 %v865, 1.442695
        %v867 = vpow.pop %v866
        %v868 = vsel %vm861, %v867, 0.0
        %869 = vadd.xlane.f32.xlu0 %v868
        %v870 = vpop.xlane.xlu0 %869
        %v871 = vrcp.pop %v870
        %v872 = vmul.f32 %v867, %v871
        %v874 = vsel %vm861, %v872, 0
        %876 = vmatprep.subr.mxu0 0.0
        %877 = vmatpush1.msra.mxu0 %v782
        %878 = vmatprep.subr.mxu0 0.0
        %879 = vmatpush1.msra.mxu0 0.0
        %880 = vmatprep.subr.mxu0 0.0
        %881 = vmatpush1.msra.mxu0 0.0
        %882 = vmatprep.subr.mxu0 0.0
        %883 = vmatpush1.msra.mxu0 0.0
        %884 = vmatprep.subr.mxu0 0.0
        %885 = vmatpush1.msra.mxu0 0.0
        %886 = vmatprep.subr.mxu0 0.0
        %887 = vmatpush1.msra.mxu0 0.0
        %888 = vmatprep.subr.mxu0 0.0
        %889 = vmatpush1.msra.mxu0 0.0
        %890 = vmatprep.subr.mxu0 0.0
        %891 = vmatpush1.msra.mxu0 0.0
        %892 = vmatprep.subr.mxu0 0.0
        %893 = vmatpush1.msra.mxu0 0.0
        %894 = vmatprep.subr.mxu0 0.0
        %895 = vmatpush1.msra.mxu0 0.0
        %896 = vmatprep.subr.mxu0 0.0
        %897 = vmatpush1.msra.mxu0 0.0
        %898 = vmatprep.subr.mxu0 0.0
        %899 = vmatpush1.msra.mxu0 0.0
        %900 = vmatprep.subr.mxu0 0.0
        %901 = vmatpush1.msra.mxu0 0.0
        %902 = vmatprep.subr.mxu0 0.0
        %903 = vmatpush1.msra.mxu0 0.0
        %904 = vmatprep.subr.mxu0 0.0
        %905 = vmatpush1.msra.mxu0 0.0
        %906 = vmatprep.subr.mxu0 0.0
        %907 = vmatpush1.msra.mxu0 0.0
        %908 = vmatprep.subr.mxu0 0.0
        %909 = vmatpush1.msra.mxu0 0.0
        %910 = vmatprep.subr.mxu0 0.0
        %911 = vmatpush1.msra.mxu0 0.0
        %912 = vmatprep.subr.mxu0 0.0
        %913 = vmatpush1.msra.mxu0 0.0
        %914 = vmatprep.subr.mxu0 0.0
        %915 = vmatpush1.msra.mxu0 0.0
        %916 = vmatprep.subr.mxu0 0.0
        %917 = vmatpush1.msra.mxu0 0.0
        %918 = vmatprep.subr.mxu0 0.0
        %919 = vmatpush1.msra.mxu0 0.0
        %920 = vmatprep.subr.mxu0 0.0
        %921 = vmatpush1.msra.mxu0 0.0
        %922 = vmatprep.subr.mxu0 0.0
        %923 = vmatpush1.msra.mxu0 0.0
        %924 = vmatprep.subr.mxu0 0.0
        %925 = vmatpush1.msra.mxu0 0.0
        %926 = vmatprep.subr.mxu0 0.0
        %927 = vmatpush1.msra.mxu0 0.0
        %928 = vmatprep.subr.mxu0 0.0
        %929 = vmatpush1.msra.mxu0 0.0
        %930 = vmatprep.subr.mxu0 0.0
        %931 = vmatpush1.msra.mxu0 0.0
        %932 = vmatprep.subr.mxu0 0.0
        %933 = vmatpush1.msra.mxu0 0.0
        %934 = vmatprep.subr.mxu0 0.0
        %935 = vmatpush1.msra.mxu0 0.0
        %936 = vmatprep.subr.mxu0 0.0
        %937 = vmatpush1.msra.mxu0 0.0
        %938 = vmatprep.subr.mxu0 0.0
        %939 = vmatpush1.msra.mxu0 0.0
        %940 = vmatprep.mubr.f32.mxu0 0.0
        %941 = vmatmul.mubr.f32.gmra.mrb[0].mxu0 %v874
        %v942 = vpop.f32.mrb[0].mxu0
        %v943 = vadd.f32 0.0, %v942
        %v944 = vpop.f32.mrb[0].mxu0
        %945 = vdwg.mxu0
        %v946 = vld [vmem:[%s9] sm:$0xff]
        %v947 = vld [vmem:[%s9 + $0x8] sm:$0xff]
        %v948 = vld [vmem:[%s9 + $0x10] sm:$0xff]
        %v949 = vld [vmem:[%s9 + $0x18] sm:$0xff]
        %v950 = vld [vmem:[%s10] sm:$0x1]
        %v952 = vlaneseq
        %v953 = vshrl.u32 %v952, 7
        %v954 = vsub.s32 0, %v953
        %v955 = vrot.slane %v950, %v954
        %v958 = vsel %vm543, %v943, 0
        %960 = vmatprep.subr.mxu0 0.0
        %961 = vmatpush1.msra.mxu0 %v946
        %962 = vmatprep.subr.mxu0 0.0
        %963 = vmatpush1.msra.mxu0 %v947
        %964 = vmatprep.subr.mxu0 0.0
        %965 = vmatpush1.msra.mxu0 %v948
        %966 = vmatprep.subr.mxu0 0.0
        %967 = vmatpush1.msra.mxu0 %v949
        %968 = vmatprep.subr.mxu0 0.0
        %969 = vmatpush1.msra.mxu0 0.0
        %970 = vmatprep.subr.mxu0 0.0
        %971 = vmatpush1.msra.mxu0 0.0
        %972 = vmatprep.subr.mxu0 0.0
        %973 = vmatpush1.msra.mxu0 0.0
        %974 = vmatprep.subr.mxu0 0.0
        %975 = vmatpush1.msra.mxu0 0.0
        %976 = vmatprep.subr.mxu0 0.0
        %977 = vmatpush1.msra.mxu0 0.0
        %978 = vmatprep.subr.mxu0 0.0
        %979 = vmatpush1.msra.mxu0 0.0
        %980 = vmatprep.subr.mxu0 0.0
        %981 = vmatpush1.msra.mxu0 0.0
        %982 = vmatprep.subr.mxu0 0.0
        %983 = vmatpush1.msra.mxu0 0.0
        %984 = vmatprep.subr.mxu0 0.0
        %985 = vmatpush1.msra.mxu0 0.0
        %986 = vmatprep.subr.mxu0 0.0
        %987 = vmatpush1.msra.mxu0 0.0
        %988 = vmatprep.subr.mxu0 0.0
        %989 = vmatpush1.msra.mxu0 0.0
        %990 = vmatprep.subr.mxu0 0.0
        %991 = vmatpush1.msra.mxu0 0.0
        %992 = vmatprep.subr.mxu0 0.0
        %993 = vmatpush1.msra.mxu0 0.0
        %994 = vmatprep.subr.mxu0 0.0
        %995 = vmatpush1.msra.mxu0 0.0
        %996 = vmatprep.subr.mxu0 0.0
        %997 = vmatpush1.msra.mxu0 0.0
        %998 = vmatprep.subr.mxu0 0.0
        %999 = vmatpush1.msra.mxu0 0.0
        %1000 = vmatprep.subr.mxu0 0.0
        %1001 = vmatpush1.msra.mxu0 0.0
        %1002 = vmatprep.subr.mxu0 0.0
        %1003 = vmatpush1.msra.mxu0 0.0
        %1004 = vmatprep.subr.mxu0 0.0
        %1005 = vmatpush1.msra.mxu0 0.0
        %1006 = vmatprep.subr.mxu0 0.0
        %1007 = vmatpush1.msra.mxu0 0.0
        %1008 = vmatprep.subr.mxu0 0.0
        %1009 = vmatpush1.msra.mxu0 0.0
        %1010 = vmatprep.subr.mxu0 0.0
        %1011 = vmatpush1.msra.mxu0 0.0
        %1012 = vmatprep.subr.mxu0 0.0
        %1013 = vmatpush1.msra.mxu0 0.0
        %1014 = vmatprep.subr.mxu0 0.0
        %1015 = vmatpush1.msra.mxu0 0.0
        %1016 = vmatprep.subr.mxu0 0.0
        %1017 = vmatpush1.msra.mxu0 0.0
        %1018 = vmatprep.subr.mxu0 0.0
        %1019 = vmatpush1.msra.mxu0 0.0
        %1020 = vmatprep.subr.mxu0 0.0
        %1021 = vmatpush1.msra.mxu0 0.0
        %1022 = vmatprep.subr.mxu0 0.0
        %1023 = vmatpush1.msra.mxu0 0.0
        %1024 = vmatprep.mubr.f32.mxu0 0.0
        %1025 = vmatmul.mubr.f32.gmra.mrb[0].mxu0 %v958
        %v1026 = vpop.f32.mrb[0].mxu0
        %v1027 = vadd.f32 %v955, %v1026
        %v1028 = vpop.f32.mrb[0].mxu0
        %1029 = vdwg.mxu0
        %1030 = vst.msk [vmem:[%s528] sm:$0xff] %vm543, %v1027
        %s1031 = sand.u32 %s287, 1
        %s1032 = scalar_lea.sflag [#allocation4], %s1031
        %s1033 = sand.u32 %s287, 1
        %s1034 = smul.addr %s1033, 8
        %s1035 = scalar_lea.vmem [#allocation14], %s1034
        // Predicated region
        $region93: #{tpu_custom_call.1} parent=63 // pred_check
          %p1036 = pneg %p297
        $region94: #{tpu_custom_call.1} parent=63 // pred_check_branch
          %1038 = sbr.rel (%p1036) target = $region96
        $region95: #{tpu_custom_call.1} parent=63 // pred_region
          %s1040 = ssub.s32 128, 128
          %1041 = vsyncadd %s1032, %s1040
          %s1042 = smul.addr %s33, 128
          %s1043 = scalar_lea.hbm %s11, %s1042
          %s1045 = sshll.u32 %s1035, 4
          %s1046 = int_to_ptr.vmem [resolvable:$true] %s1045
          %1048 = dma.vmem_to_hbm [thread:$0]  %s1046, 128, %s1043, %s1032
        $region96: #{tpu_custom_call.1} parent=63 // pred_fallthru
          _
      $region64: #{tpu_custom_call.1} parent=5 // pred_fallthru
        _
      %p1049 = scmp.le.s32.totalorder 2, %s28
      // Predicated region
      $region97: #{tpu_custom_call.1} parent=5 // pred_check
        %p1050 = pneg %p1049
      $region98: #{tpu_custom_call.1} parent=5 // pred_check_branch
        %1052 = sbr.rel (%p1050) target = $region100
      $region99: #{tpu_custom_call.1} parent=5 // pred_region
        %s1053 = ssub.s32 %s28, 2
        // Predicated region
        $region101: #{tpu_custom_call.1} parent=99 // pred_check
          %p1054 = pneg %p303
        $region102: #{tpu_custom_call.1} parent=99 // pred_check_branch
          %1056 = sbr.rel (%p1054) target = $region104
        $region103: #{tpu_custom_call.1} parent=99 // pred_region
          %s1057 = sand.u32 %s288, 1
          %s1058 = scalar_lea.sflag [#allocation4], %s1057
          %s1059 = sand.u32 %s288, 1
          %s1060 = smul.addr %s1059, 8
          %s1061 = scalar_lea.vmem [#allocation14], %s1060
          %1062 = dma.done %s1058, 128
        $region104: #{tpu_custom_call.1} parent=99 // pred_fallthru
          _
      $region100: #{tpu_custom_call.1} parent=5 // pred_fallthru
        _
    $region6: #{tpu_custom_call.1} parent=1 // loop_footer
      %s32 = sadd.s32 1, %s28
    $region7: #{tpu_custom_call.1} parent=1 // loop_footer_branch
      %27 = sbr.rel target = $region3
    $region8: #{tpu_custom_call.1} parent=1 // loop_exit
      _
    %1063 = vsyncpa [#allocation3], 1
    %s1064 = scalar_lea.sflag [#allocation3], 1
    %1065 = vsyncpa %s1064, 1
    %1066 = vsyncpa [#allocation6], 1
    %s1067 = scalar_lea.sflag [#allocation6], 1
    %1068 = vsyncpa %s1067, 1
    %1069 = vsyncpa [#allocation9], 1
    %1070 = vsyncpa [#allocation12], 1
    %1071 = vsyncpa [#allocation4], 1
    %s1072 = scalar_lea.sflag [#allocation4], 1
    %1073 = vsyncpa %s1072, 1

</llo_original>
